<compile_context>
chip_gen: v6e
topology: v6e:2x2x1
jax: 0.10.0
libtpu: 0.0.40
codegen_flags: <defaults>
</compile_context>

<pallas_src>
import functools

import jax
import jax.numpy as jnp
from jax.experimental import pallas as pl
from jax.experimental.pallas import tpu as pltpu

LANES = 128
ACC_ROWS = 8           # (8, 128) f32 = one vreg-shaped accumulator slab
MAX_ROW_TILE = 2048    # 2048 x 128 f32 = 1 MiB per input tile
MIN_ROW_TILE = 256     # floor for the exact-divisor search (perf review)


def _sublane_multiple(*dtypes):
    m = 8
    for d in dtypes:
        m = max(m, {4: 8, 2: 16, 1: 32}.get(jnp.dtype(d).itemsize, 8))
    return m


def _round_up(x, m):
    return ((x + m - 1) // m) * m


def _choose_tiling(rows, sublane):
    """Pick (row_tile, grid_j) for `rows` 128-lane rows per sample.

    Prefers an exact tiling with a LARGE tile; never picks a tile below
    MIN_ROW_TILE just to avoid a ragged tail (the ragged tail is handled with
    an in-kernel mask instead).
    """
    if rows <= MAX_ROW_TILE:
        return _round_up(rows, sublane), 1
    start = (MAX_ROW_TILE // sublane) * sublane
    for cand in range(start, MIN_ROW_TILE - 1, -sublane):
        if rows % cand == 0:
            return cand, rows // cand          # exact, no mask needed
    row_tile = MAX_ROW_TILE                    # multiple of any sublane packing
    return row_tile, pl.cdiv(rows, row_tile)   # ragged last tile, masked


def _bce_dice_kernel(p_ref, t_ref, o_ref, *, valid_rows, row_tile, ragged,
                     binary_target):
    j = pl.program_id(1)

    # Output block doubles as the accumulator (same block index across j).
    @pl.when(j == 0)
    def _():
        o_ref[...] = jnp.zeros_like(o_ref)

    # Native-dtype DMA; cast on the VPU (hidden under the DMA).
    p = p_ref[0].astype(jnp.float32)           # (row_tile, 128)
    t = t_ref[0].astype(jnp.float32)

    if ragged:
        # Last tile extends past the real data: zero it (reduction-neutral for
        # both the clamped BCE terms and the Dice sums).
        row_ids = jax.lax.broadcasted_iota(jnp.int32, (row_tile, LANES), 0)
        valid = (row_ids + j * row_tile) < valid_rows
        p = jnp.where(valid, p, 0.0)
        t = jnp.where(valid, t, 0.0)

    # BCE term, accumulated with its sign flipped (negated once in the wrapper).
    # nn.BCELoss clamps the log terms at -100, which also makes zero padding
    # exactly neutral (0 * -100 == 0, log(1) == 0).
    if binary_target:
        # Single transcendental per element (EUP relief on v7x); valid only for
        # hard {0, 1} targets.
        g = jnp.maximum(jnp.log(jnp.where(t > 0.5, p, 1.0 - p)), -100.0)
    else:
        log_p = jnp.maximum(jnp.log(p), -100.0)
        log_1mp = jnp.maximum(jnp.log(1.0 - p), -100.0)
        g = log_1mp + t * (log_p - log_1mp)    # == t*log(p) + (1-t)*log(1-p)

    # Fold the (row_tile, 128) tile into vreg-shaped (8, 128) partials with
    # pure elementwise adds; cross-lane reductions happen only in the wrapper.
    def fold(x):
        return jnp.sum(x.reshape(-1, ACC_ROWS, LANES), axis=0)

    o_ref[0, 0] += fold(g)          # -BCE partial sum
    o_ref[0, 1] += fold(p * t)      # intersection partial sum
    o_ref[0, 2] += fold(p + t)      # sum(p) + sum(t) partial sum


def bce_dice_loss(pred, target, smooth=1.0, assume_binary_target=False):
    """Pallas TPU implementation of BceDiceLoss.forward -> scalar loss."""
    n = pred.shape[0]
    num_el = 1
    for d in pred.shape[1:]:
        num_el *= d

    sublane = _sublane_multiple(pred.dtype, target.dtype)

    p = pred.reshape(n, num_el)
    t = target.reshape(n, num_el)
    if num_el % LANES != 0:
        # TODO(synk): avoid this full-tensor pad (extra HBM pass) by going
        # manual-DMA over the flat layout; typical conv feature maps never
        # take this branch (C*H*W is a multiple of 128).
        pad = LANES - num_el % LANES
        p = jnp.pad(p, ((0, 0), (0, pad)))
        t = jnp.pad(t, ((0, 0), (0, pad)))
    rows = p.shape[1] // LANES
    row_tile, grid_j = _choose_tiling(rows, sublane)
    ragged = (row_tile * grid_j != rows)

    p3 = p.reshape(n, rows, LANES)    # zero-copy reshape
    t3 = t.reshape(n, rows, LANES)

    partials = pl.pallas_call(
        functools.partial(
            _bce_dice_kernel,
            valid_rows=rows,
            row_tile=row_tile,
            ragged=ragged,
            binary_target=bool(assume_binary_target),
        ),
        out_shape=jax.ShapeDtypeStruct((n, 3, ACC_ROWS, LANES), jnp.float32),
        grid_spec=pltpu.PrefetchScalarGridSpec(
            num_scalar_prefetch=0,
            grid=(n, grid_j),
            in_specs=[
                pl.BlockSpec((1, row_tile, LANES), lambda b, j: (b, j, 0)),
                pl.BlockSpec((1, row_tile, LANES), lambda b, j: (b, j, 0)),
            ],
            # Per-sample output block, resident across the row-tile axis.
            out_specs=pl.BlockSpec((1, 3, ACC_ROWS, LANES),
                                   lambda b, j: (b, 0, 0, 0)),
        ),
        compiler_params=pltpu.CompilerParams(
            # Batch axis has no carried state -> megacore-shardable on v7x.
            dimension_semantics=("parallel", "arbitrary"),
            vmem_limit_bytes=32 * 1024 * 1024,
        ),
    )(p3, t3)

    # Tiny scalar epilogue in plain JAX (keeps the kernel carry-free).
    per_b = jnp.sum(partials, axis=(2, 3))                    # (n, 3)
    bce_mean = -jnp.sum(per_b[:, 0]) / float(n * num_el)
    inter = per_b[:, 1]
    denom = per_b[:, 2]
    dice_score = (2.0 * inter + float(smooth)) / (denom + float(smooth))
    dice_loss = 1.0 - jnp.sum(dice_score) / float(n)
    return dice_loss + bce_mean


def _bce_dice_loss_ref(pred, target, smooth=1.0):
    n = pred.shape[0]
    p = pred.reshape(n, -1).astype(jnp.float32)
    t = target.reshape(n, -1).astype(jnp.float32)
    log_p = jnp.maximum(jnp.log(p), -100.0)
    log_1mp = jnp.maximum(jnp.log(1.0 - p), -100.0)
    bce = jnp.mean(-(t * log_p + (1.0 - t) * log_1mp))
    inter = jnp.sum(p * t, axis=1)
    dice_score = (2.0 * inter + smooth) / (jnp.sum(p, axis=1) + jnp.sum(t, axis=1) + smooth)
    dice_loss = 1.0 - jnp.sum(dice_score) / n
    return dice_loss + bce


if __name__ == "__main__":
    key = jax.random.PRNGKey(0)
    kp, kt = jax.random.split(key)
    # Segmentation-head-like shapes: N=2, C=4, H=W=16; pred are probabilities.
    pred = jax.nn.sigmoid(jax.random.normal(kp, (2, 4, 16, 16), dtype=jnp.float32))
    target = (jax.random.uniform(kt, (2, 4, 16, 16)) > 0.5).astype(jnp.float32)

    loss = bce_dice_loss(pred, target, smooth=1.0)
    loss = jax.block_until_ready(loss)

    ref = _bce_dice_loss_ref(pred, target, smooth=1.0)
    assert jnp.allclose(loss, ref, rtol=1e-5, atol=1e-5), (loss, ref)
    print("KERNEL_OK")
</pallas_src>

<mosaic_0001>
module attributes {stable_mosaic.version = 11 : i64} {
  func.func @_bce_dice_kernel(%arg0: i32, %arg1: i32, %arg2: memref<1x8x128xf32, #tpu.memory_space<vmem>>, %arg3: memref<1x8x128xf32, #tpu.memory_space<vmem>>, %arg4: memref<1x3x8x128xf32, #tpu.memory_space<vmem>>) attributes {dimension_semantics = [#tpu.dimension_semantics<parallel>, #tpu.dimension_semantics<arbitrary>], iteration_bounds = array<i64: 2, 1>, scalar_prefetch = 0 : i64, scratch_operands = 0 : i64, tpu.core_type = #tpu.core_type<tc>, window_params = [{transform_indices = @transform_0, window_bounds = array<i64: 1, 8, 128>}, {transform_indices = @transform_1, window_bounds = array<i64: 1, 8, 128>}, {transform_indices = @transform_2, window_bounds = array<i64: 1, 3, 8, 128>}]} {
    %c0_i32 = arith.constant 0 : i32
    %0 = arith.cmpi eq, %arg1, %c0_i32 : i32
    %1 = arith.extui %0 : i1 to i32
    %c0_i32_0 = arith.constant 0 : i32
    %2 = arith.cmpi ne, %1, %c0_i32_0 : i32
    scf.if %2 {
      %cst_33 = arith.constant 0.000000e+00 : f32
      %44 = vector.broadcast %cst_33 : f32 to vector<1x3x8x128xf32>
      %c0_34 = arith.constant 0 : index
      %c0_35 = arith.constant 0 : index
      %c0_36 = arith.constant 0 : index
      %c0_37 = arith.constant 0 : index
      %45 = vector.load %arg4[%c0_34, %c0_35, %c0_36, %c0_37] : memref<1x3x8x128xf32, #tpu.memory_space<vmem>>, vector<1x3x8x128xf32>
      tpu.vector_store %arg4[%c0_34, %c0_35, %c0_36, %c0_37], %44 {strides = array<i32>} : memref<1x3x8x128xf32, #tpu.memory_space<vmem>>, vector<1x3x8x128xf32>,
    } else {
    }
    %c0 = arith.constant 0 : index
    %c0_1 = arith.constant 0 : index
    %c0_2 = arith.constant 0 : index
    %3 = vector.load %arg2[%c0, %c0_1, %c0_2] : memref<1x8x128xf32, #tpu.memory_space<vmem>>, vector<1x8x128xf32>
    %4 = vector.shape_cast %3 : vector<1x8x128xf32> to vector<8x128xf32>
    %c0_3 = arith.constant 0 : index
    %c0_4 = arith.constant 0 : index
    %c0_5 = arith.constant 0 : index
    %5 = vector.load %arg3[%c0_3, %c0_4, %c0_5] : memref<1x8x128xf32, #tpu.memory_space<vmem>>, vector<1x8x128xf32>
    %6 = vector.shape_cast %5 : vector<1x8x128xf32> to vector<8x128xf32>
    %7 = math.log %4 : vector<8x128xf32>
    %cst = arith.constant -1.000000e+02 : f32
    %8 = vector.broadcast %cst : f32 to vector<8x128xf32>
    %9 = arith.maximumf %7, %8 : vector<8x128xf32>
    %cst_6 = arith.constant 1.000000e+00 : f32
    %10 = vector.broadcast %cst_6 : f32 to vector<8x128xf32>
    %11 = arith.subf %10, %4 : vector<8x128xf32>
    %12 = math.log %11 : vector<8x128xf32>
    %cst_7 = arith.constant -1.000000e+02 : f32
    %13 = vector.broadcast %cst_7 : f32 to vector<8x128xf32>
    %14 = arith.maximumf %12, %13 : vector<8x128xf32>
    %15 = arith.subf %9, %14 : vector<8x128xf32>
    %16 = arith.mulf %6, %15 : vector<8x128xf32>
    %17 = arith.addf %14, %16 : vector<8x128xf32>
    %c0_8 = arith.constant 0 : index
    %c0_9 = arith.constant 0 : index
    %c0_10 = arith.constant 0 : index
    %c0_11 = arith.constant 0 : index
    %18 = vector.load %arg4[%c0_8, %c0_9, %c0_10, %c0_11] : memref<1x3x8x128xf32, #tpu.memory_space<vmem>>, vector<1x1x8x128xf32>
    %19 = vector.shape_cast %18 : vector<1x1x8x128xf32> to vector<8x128xf32>
    %20 = vector.shape_cast %17 : vector<8x128xf32> to vector<1x8x128xf32>
    %cst_12 = arith.constant dense<0.000000e+00> : vector<8x128xf32>
    %21 = vector.multi_reduction <add>, %20, %cst_12 [0] : vector<1x8x128xf32> to vector<8x128xf32>
    %22 = arith.addf %19, %21 : vector<8x128xf32>
    %c0_13 = arith.constant 0 : index
    %c0_14 = arith.constant 0 : index
    %c0_15 = arith.constant 0 : index
    %c0_16 = arith.constant 0 : index
    %23 = vector.load %arg4[%c0_13, %c0_14, %c0_15, %c0_16] : memref<1x3x8x128xf32, #tpu.memory_space<vmem>>, vector<1x1x8x128xf32>
    %24 = vector.shape_cast %23 : vector<1x1x8x128xf32> to vector<8x128xf32>
    %25 = vector.shape_cast %22 : vector<8x128xf32> to vector<1x1x8x128xf32>
    tpu.vector_store %arg4[%c0_13, %c0_14, %c0_15, %c0_16], %25 {strides = array<i32>} : memref<1x3x8x128xf32, #tpu.memory_space<vmem>>, vector<1x1x8x128xf32>,
    %c0_17 = arith.constant 0 : index
    %c1 = arith.constant 1 : index
    %c0_18 = arith.constant 0 : index
    %c0_19 = arith.constant 0 : index
    %26 = vector.load %arg4[%c0_17, %c1, %c0_18, %c0_19] : memref<1x3x8x128xf32, #tpu.memory_space<vmem>>, vector<1x1x8x128xf32>
    %27 = vector.shape_cast %26 : vector<1x1x8x128xf32> to vector<8x128xf32>
    %28 = arith.mulf %4, %6 : vector<8x128xf32>
    %29 = vector.shape_cast %28 : vector<8x128xf32> to vector<1x8x128xf32>
    %cst_20 = arith.constant dense<0.000000e+00> : vector<8x128xf32>
    %30 = vector.multi_reduction <add>, %29, %cst_20 [0] : vector<1x8x128xf32> to vector<8x128xf32>
    %31 = arith.addf %27, %30 : vector<8x128xf32>
    %c0_21 = arith.constant 0 : index
    %c1_22 = arith.constant 1 : index
    %c0_23 = arith.constant 0 : index
    %c0_24 = arith.constant 0 : index
    %32 = vector.load %arg4[%c0_21, %c1_22, %c0_23, %c0_24] : memref<1x3x8x128xf32, #tpu.memory_space<vmem>>, vector<1x1x8x128xf32>
    %33 = vector.shape_cast %32 : vector<1x1x8x128xf32> to vector<8x128xf32>
    %34 = vector.shape_cast %31 : vector<8x128xf32> to vector<1x1x8x128xf32>
    tpu.vector_store %arg4[%c0_21, %c1_22, %c0_23, %c0_24], %34 {strides = array<i32>} : memref<1x3x8x128xf32, #tpu.memory_space<vmem>>, vector<1x1x8x128xf32>,
    %c0_25 = arith.constant 0 : index
    %c2 = arith.constant 2 : index
    %c0_26 = arith.constant 0 : index
    %c0_27 = arith.constant 0 : index
    %35 = vector.load %arg4[%c0_25, %c2, %c0_26, %c0_27] : memref<1x3x8x128xf32, #tpu.memory_space<vmem>>, vector<1x1x8x128xf32>
    %36 = vector.shape_cast %35 : vector<1x1x8x128xf32> to vector<8x128xf32>
    %37 = arith.addf %4, %6 : vector<8x128xf32>
    %38 = vector.shape_cast %37 : vector<8x128xf32> to vector<1x8x128xf32>
    %cst_28 = arith.constant dense<0.000000e+00> : vector<8x128xf32>
    %39 = vector.multi_reduction <add>, %38, %cst_28 [0] : vector<1x8x128xf32> to vector<8x128xf32>
    %40 = arith.addf %36, %39 : vector<8x128xf32>
    %c0_29 = arith.constant 0 : index
    %c2_30 = arith.constant 2 : index
    %c0_31 = arith.constant 0 : index
    %c0_32 = arith.constant 0 : index
    %41 = vector.load %arg4[%c0_29, %c2_30, %c0_31, %c0_32] : memref<1x3x8x128xf32, #tpu.memory_space<vmem>>, vector<1x1x8x128xf32>
    %42 = vector.shape_cast %41 : vector<1x1x8x128xf32> to vector<8x128xf32>
    %43 = vector.shape_cast %40 : vector<8x128xf32> to vector<1x1x8x128xf32>
    tpu.vector_store %arg4[%c0_29, %c2_30, %c0_31, %c0_32], %43 {strides = array<i32>} : memref<1x3x8x128xf32, #tpu.memory_space<vmem>>, vector<1x1x8x128xf32>,
    return
  }
  func.func @transform_0(%arg0: i32, %arg1: i32) -> (i32, i32, i32) {
    %c0_i32 = arith.constant 0 : i32
    %c0_i32_0 = arith.constant 0 : i32
    return %arg0, %arg1, %c0_i32 : i32, i32, i32
  }
  func.func @transform_1(%arg0: i32, %arg1: i32) -> (i32, i32, i32) {
    %c0_i32 = arith.constant 0 : i32
    %c0_i32_0 = arith.constant 0 : i32
    return %arg0, %arg1, %c0_i32 : i32, i32, i32
  }
  func.func @transform_2(%arg0: i32, %arg1: i32) -> (i32, i32, i32, i32) {
    %c0_i32 = arith.constant 0 : i32
    %c0_i32_0 = arith.constant 0 : i32
    %c0_i32_1 = arith.constant 0 : i32
    %c0_i32_2 = arith.constant 0 : i32
    return %arg0, %c0_i32, %c0_i32_0, %c0_i32_1 : i32, i32, i32, i32
  }
}

</mosaic_0001>

<llo_original>
// kernel: tpu_custom_call.1
$region0: #{tpu_custom_call.1}
  #allocation0 [shape = 'u32[]', space=smem, size = 0x4, offset = 0x4, fixed_abs, tag = 'smem constant byte address 0x4 - core index']
  #allocation1 [shape = 'u32[144,128]{1,0:T(1,128)}', space=vmem, size = 0x12000, scoped, tag = 'internal scratch']
  %s0 = inlined_call_operand.hbm [shape: f32[2,8,128], index: 0, kind: input, shape index: {}]
  %s1 = inlined_call_operand.hbm [shape: f32[2,8,128], index: 1, kind: input, shape index: {}]
  %s2 = inlined_call_operand.hbm [shape: f32[2,3,8,128], index: 2, kind: output, shape index: {}]
  %s3 = sld [smem:[#allocation0]]
  $region53: #{tpu_custom_call.1} parent=0
    _
  %s5 = ssub.s32 1, %s3
  %s6 = scalar_select 0, %s5, %s3
  $region1: #{tpu_custom_call.1} parent=0
    #allocation2 [shape = 'u8[8192]{0}', space=vmem, size = 0x2000, scoped, tag = 'input window, operand 0']
    #allocation3 [shape = 's32[2]{0}', space=sflag, size = 0x8, scoped, tag = 'scoped memory for tpu_custom_call.1']
    #allocation4 [shape = 's32[2]{0}', space=sflag, size = 0x8, scoped, tag = 'scoped memory for tpu_custom_call.1']
    #allocation5 [shape = 'u8[8192]{0}', space=vmem, size = 0x2000, scoped, tag = 'input window, operand 1']
    #allocation6 [shape = 's32[2]{0}', space=sflag, size = 0x8, scoped, tag = 'scoped memory for tpu_custom_call.1']
    #allocation7 [shape = 'u8[24576]{0}', space=vmem, size = 0x6000, scoped, tag = 'output window, operand 0']
    %7 = vsyncpa [#allocation3], 0
    %s8 = scalar_lea.sflag [#allocation3], 1
    %9 = vsyncpa %s8, 0
    %10 = vsyncpa [#allocation6], 0
    %s11 = scalar_lea.sflag [#allocation6], 1
    %12 = vsyncpa %s11, 0
    %13 = vsyncpa [#allocation4], 0
    %s14 = scalar_lea.sflag [#allocation4], 1
    %15 = vsyncpa %s14, 0
    loop: start=0, step=1, limit=4
    $region2: #{tpu_custom_call.1} parent=1 // loop_pre_header
      _
    $region3: #{tpu_custom_call.1} parent=1 // loop_header
      %s17 = sphi 0, %s21
      %p18 = scmp.ge.s32.totalorder %s17, 4
      %s24 = sphi 0, %s36
      %s25 = sphi 0, %s32
      %s26 = sphi 0, %s24
      %s27 = sphi 0, %s25
      %s28 = sphi 0, %s26
      %s29 = sphi 0, %s27
      %s41 = sphi 0, %s43
      %s44 = sphi 0, %s41
      %s45 = sphi 0, %s44
      %s61 = sphi 0, %s45
      %s69 = sphi 0, %s71
      %s72 = sphi 0, %s69
      %s73 = sphi 0, %s72
      %s89 = sphi 0, %s73
      %s95 = sphi 0, %s97
      %s98 = sphi 0, %s95
      %s99 = sphi 0, %s98
      %s115 = sphi 0, %s99
    $region4: #{tpu_custom_call.1} parent=1 // loop_header_branch
      %20 = sbr.rel (%p18) target = $region8
    $region5: #{tpu_custom_call.1} parent=1 // loop_body
      %s22 = ssub.s32 %s17, 1
      %s23 = ssub.s32 %s17, 2
      %s30 = sadd.s32 1, %s25
      %p31 = scmp.ge.s32.totalorder %s30, 1
      %s32 = scalar_select %p31, 0, %s30
      %s33 = sadd.s32 1, %s24
      %s34 = scalar_select %p31, %s33, %s24
      %p35 = scmp.ge.s32.totalorder %s34, 2
      %s36 = scalar_select %p35, 0, %s34
      %s37 = ssub.s32 %s24, %s36
      %s38 = ssub.s32 %s25, %s32
      %s39 = sor.u32 %s37, %s38
      %p40 = scmp.eq.s32.totalorder %s39, 0
      %s42 = sadd.s32 %s41, 1
      %s43 = scalar_select %p40, %s41, %s42
      %p46 = pneg %p40
      %p47 = scmp.eq.s32.totalorder %s17, 1
      %p48 = por %p46, %p47
      %p49 = scmp.ne.s32.totalorder %s41, %s44
      %p50 = scmp.eq.s32.totalorder %s17, 0
      %p51 = por %p49, %p50
      %p52 = scmp.ne.s32.totalorder %s41, %s44
      %p53 = scmp.eq.s32.totalorder %s22, 1
      %p54 = por %p52, %p53
      %p55 = scmp.ne.s32.totalorder %s44, %s45
      %p56 = scmp.eq.s32.totalorder %s22, 0
      %p57 = por %p55, %p56
      %p58 = scmp.ne.s32.totalorder %s44, %s45
      %p59 = scmp.eq.s32.totalorder %s23, 1
      %p60 = por %p58, %p59
      %p62 = scmp.ne.s32.totalorder %s45, %s61
      %p63 = scmp.eq.s32.totalorder %s23, 0
      %p64 = por %p62, %p63
      %s65 = ssub.s32 %s24, %s36
      %s66 = ssub.s32 %s25, %s32
      %s67 = sor.u32 %s65, %s66
      %p68 = scmp.eq.s32.totalorder %s67, 0
      %s70 = sadd.s32 %s69, 1
      %s71 = scalar_select %p68, %s69, %s70
      %p74 = pneg %p68
      %p75 = scmp.eq.s32.totalorder %s17, 1
      %p76 = por %p74, %p75
      %p77 = scmp.ne.s32.totalorder %s69, %s72
      %p78 = scmp.eq.s32.totalorder %s17, 0
      %p79 = por %p77, %p78
      %p80 = scmp.ne.s32.totalorder %s69, %s72
      %p81 = scmp.eq.s32.totalorder %s22, 1
      %p82 = por %p80, %p81
      %p83 = scmp.ne.s32.totalorder %s72, %s73
      %p84 = scmp.eq.s32.totalorder %s22, 0
      %p85 = por %p83, %p84
      %p86 = scmp.ne.s32.totalorder %s72, %s73
      %p87 = scmp.eq.s32.totalorder %s23, 1
      %p88 = por %p86, %p87
      %p90 = scmp.ne.s32.totalorder %s73, %s89
      %p91 = scmp.eq.s32.totalorder %s23, 0
      %p92 = por %p90, %p91
      %s93 = ssub.s32 %s24, %s36
      %p94 = scmp.eq.s32.totalorder %s93, 0
      %s96 = sadd.s32 %s95, 1
      %s97 = scalar_select %p94, %s95, %s96
      %p100 = pneg %p94
      %p101 = scmp.eq.s32.totalorder %s17, 1
      %p102 = por %p100, %p101
      %p103 = scmp.ne.s32.totalorder %s95, %s98
      %p104 = scmp.eq.s32.totalorder %s17, 0
      %p105 = por %p103, %p104
      %p106 = scmp.ne.s32.totalorder %s95, %s98
      %p107 = scmp.eq.s32.totalorder %s22, 1
      %p108 = por %p106, %p107
      %p109 = scmp.ne.s32.totalorder %s98, %s99
      %p110 = scmp.eq.s32.totalorder %s22, 0
      %p111 = por %p109, %p110
      %p112 = scmp.ne.s32.totalorder %s98, %s99
      %p113 = scmp.eq.s32.totalorder %s23, 1
      %p114 = por %p112, %p113
      %p116 = scmp.ne.s32.totalorder %s99, %s115
      %p117 = scmp.eq.s32.totalorder %s23, 0
      %p118 = por %p116, %p117
      %p119 = scmp.le.s32.totalorder 1, %s17
      %p120 = scmp.lt.s32.totalorder %s17, 3
      %p121 = pnand %p119, %p120
      %p122 = pneg %p121
      // Predicated region
      $region9: #{tpu_custom_call.1} parent=5 // pred_check
        _
      $region10: #{tpu_custom_call.1} parent=5 // pred_check_branch
        %124 = sbr.rel (%p121) target = $region12
      $region11: #{tpu_custom_call.1} parent=5 // pred_region
        %s125 = ssub.s32 %s17, 1
      $region12: #{tpu_custom_call.1} parent=5 // pred_fallthru
        _
      %p126 = scmp.lt.s32.totalorder %s17, 2
      // Predicated region
      $region13: #{tpu_custom_call.1} parent=5 // pred_check
        %p127 = pneg %p126
      $region14: #{tpu_custom_call.1} parent=5 // pred_check_branch
        %129 = sbr.rel (%p127) target = $region16
      $region15: #{tpu_custom_call.1} parent=5 // pred_region
        // Predicated region
        $region17: #{tpu_custom_call.1} parent=15 // pred_check
          %p130 = pneg %p51
        $region18: #{tpu_custom_call.1} parent=15 // pred_check_branch
          %132 = sbr.rel (%p130) target = $region20
        $region19: #{tpu_custom_call.1} parent=15 // pred_region
          %s133 = sand.u32 %s41, 1
          %s134 = scalar_lea.sflag [#allocation3], %s133
          %s135 = sand.u32 %s41, 1
          %s136 = smul.addr %s135, 8
          %s137 = scalar_lea.vmem [#allocation2], %s136
          %s139 = ssub.s32 128, 128
          %140 = vsyncadd %s134, %s139
          %s141 = sadd.s32 %s25, %s24
          %s142 = smul.addr %s141, 128
          %s143 = scalar_lea.hbm %s0, %s142
          %s145 = sshll.u32 %s137, 4
          %s146 = int_to_ptr.vmem [resolvable:$true] %s145
          %148 = dma.hbm_to_vmem [thread:$0]  %s143, 128, %s146, %s134
        $region20: #{tpu_custom_call.1} parent=15 // pred_fallthru
          _
        // Predicated region
        $region21: #{tpu_custom_call.1} parent=15 // pred_check
          %p149 = pneg %p79
        $region22: #{tpu_custom_call.1} parent=15 // pred_check_branch
          %151 = sbr.rel (%p149) target = $region24
        $region23: #{tpu_custom_call.1} parent=15 // pred_region
          %s152 = sand.u32 %s69, 1
          %s153 = scalar_lea.sflag [#allocation6], %s152
          %s154 = sand.u32 %s69, 1
          %s155 = smul.addr %s154, 8
          %s156 = scalar_lea.vmem [#allocation5], %s155
          %s158 = ssub.s32 128, 128
          %159 = vsyncadd %s153, %s158
          %s160 = sadd.s32 %s25, %s24
          %s161 = smul.addr %s160, 128
          %s162 = scalar_lea.hbm %s1, %s161
          %s164 = sshll.u32 %s156, 4
          %s165 = int_to_ptr.vmem [resolvable:$true] %s164
          %167 = dma.hbm_to_vmem [thread:$0]  %s162, 128, %s165, %s153
        $region24: #{tpu_custom_call.1} parent=15 // pred_fallthru
          _
      $region16: #{tpu_custom_call.1} parent=5 // pred_fallthru
        _
      %p168 = scmp.le.s32.totalorder 1, %s17
      %p169 = scmp.lt.s32.totalorder %s17, 3
      %p170 = pnand %p168, %p169
      %p171 = pneg %p170
      // Predicated region
      $region25: #{tpu_custom_call.1} parent=5 // pred_check
        _
      $region26: #{tpu_custom_call.1} parent=5 // pred_check_branch
        %173 = sbr.rel (%p170) target = $region28
      $region27: #{tpu_custom_call.1} parent=5 // pred_region
        %s174 = ssub.s32 %s17, 1
        %s175 = sand.u32 %s44, 1
        %s176 = scalar_lea.sflag [#allocation3], %s175
        %s177 = sand.u32 %s44, 1
        %s178 = smul.addr %s177, 8
        %s179 = scalar_lea.vmem [#allocation2], %s178
        // Predicated region
        $region29: #{tpu_custom_call.1} parent=27 // pred_check
          %p180 = pneg %p57
        $region30: #{tpu_custom_call.1} parent=27 // pred_check_branch
          %182 = sbr.rel (%p180) target = $region32
        $region31: #{tpu_custom_call.1} parent=27 // pred_region
          %183 = dma.done %s176, 128
        $region32: #{tpu_custom_call.1} parent=27 // pred_fallthru
          _
        %s184 = sand.u32 %s72, 1
        %s185 = scalar_lea.sflag [#allocation6], %s184
        %s186 = sand.u32 %s72, 1
        %s187 = smul.addr %s186, 8
        %s188 = scalar_lea.vmem [#allocation5], %s187
        // Predicated region
        $region33: #{tpu_custom_call.1} parent=27 // pred_check
          %p189 = pneg %p85
        $region34: #{tpu_custom_call.1} parent=27 // pred_check_branch
          %191 = sbr.rel (%p189) target = $region36
        $region35: #{tpu_custom_call.1} parent=27 // pred_region
          %192 = dma.done %s185, 128
        $region36: #{tpu_custom_call.1} parent=27 // pred_fallthru
          _
        %s193 = sand.u32 %s44, 1
        %s194 = scalar_lea.sflag [#allocation3], %s193
        %s195 = sand.u32 %s44, 1
        %s196 = smul.addr %s195, 8
        %s197 = scalar_lea.vmem [#allocation2], %s196
        %p198 = pneg %p57
        %p199 = pneg %p54
        %s200 = sand.u32 %s72, 1
        %s201 = scalar_lea.sflag [#allocation6], %s200
        %s202 = sand.u32 %s72, 1
        %s203 = smul.addr %s202, 8
        %s204 = scalar_lea.vmem [#allocation5], %s203
        %p205 = pneg %p85
        %p206 = pneg %p82
        %p207 = pneg %p111
        %p208 = pneg %p108
        %s209 = sand.u32 %s98, 1
        %s210 = scalar_lea.sflag [#allocation4], %s209
        %s211 = sand.u32 %s98, 1
        %s212 = smul.addr %s211, 24
        %s213 = scalar_lea.vmem [#allocation7], %s212
        %p214 = scmp.eq.s32.totalorder %s27, 0
        // Predicated region
        $region37: #{tpu_custom_call.1} parent=27 // pred_check
          %p215 = pneg %p214
        $region38: #{tpu_custom_call.1} parent=27 // pred_check_branch
          %217 = sbr.rel (%p215) target = $region40
        $region39: #{tpu_custom_call.1} parent=27 // pred_region
          %218 = vst [vmem:[%s213] sm:$0xff] 0.0
          %219 = vst [vmem:[%s213 + $0x8] sm:$0xff] 0.0
          %220 = vst [vmem:[%s213 + $0x10] sm:$0xff] 0.0
        $region40: #{tpu_custom_call.1} parent=27 // pred_fallthru
          _
        %v221 = vld [vmem:[%s179] sm:$0xff]
        %v222 = vld [vmem:[%s188] sm:$0xff]
        %v223 = vlog2.pop %v221
        %v224 = vmul.f32 %v223, 0.6931472
        %v225 = vmax.f32 %v224, -100.0
        %v226 = vsub.f32 1.0, %v221
        %v227 = vlog2.pop %v226
        %v228 = vmul.f32 %v227, 0.6931472
        %v229 = vmax.f32 %v228, -100.0
        %v230 = vsub.f32 %v225, %v229
        %v231 = vmul.f32 %v222, %v230
        %v232 = vadd.f32 %v229, %v231
        %v233 = vld [vmem:[%s213] sm:$0xff]
        %v234 = vadd.f32 %v232, 0.0
        %v235 = vadd.f32 %v233, %v234
        %236 = vst [vmem:[%s213] sm:$0xff] %v235
        %s237 = scalar_lea.vmem %s213, 8 [#allocation7]
        %v238 = vld [vmem:[%s237] sm:$0xff]
        %v239 = vmul.f32 %v221, %v222
        %v240 = vadd.f32 %v239, 0.0
        %v241 = vadd.f32 %v238, %v240
        %242 = vst [vmem:[%s237] sm:$0xff] %v241
        %s243 = scalar_lea.vmem %s213, 16 [#allocation7]
        %v244 = vld [vmem:[%s243] sm:$0xff]
        %v245 = vadd.f32 %v221, %v222
        %v246 = vadd.f32 %v245, 0.0
        %v247 = vadd.f32 %v244, %v246
        %248 = vst [vmem:[%s243] sm:$0xff] %v247
        %s249 = sand.u32 %s98, 1
        %s250 = scalar_lea.sflag [#allocation4], %s249
        %s251 = sand.u32 %s98, 1
        %s252 = smul.addr %s251, 24
        %s253 = scalar_lea.vmem [#allocation7], %s252
        // Predicated region
        $region41: #{tpu_custom_call.1} parent=27 // pred_check
          %p254 = pneg %p108
        $region42: #{tpu_custom_call.1} parent=27 // pred_check_branch
          %256 = sbr.rel (%p254) target = $region44
        $region43: #{tpu_custom_call.1} parent=27 // pred_region
          %s258 = ssub.s32 384, 384
          %259 = vsyncadd %s250, %s258
          %s260 = smul.addr %s26, 3
          %s261 = smul.addr %s260, 128
          %s262 = scalar_lea.hbm %s2, %s261
          %s263 = sshll.u32 %s253, 4
          %s264 = int_to_ptr.vmem [resolvable:$true] %s263
          %269 = dma.vmem_to_hbm [thread:$0]  %s264, 384, %s262, %s250, 128, 128, 8
        $region44: #{tpu_custom_call.1} parent=27 // pred_fallthru
          _
      $region28: #{tpu_custom_call.1} parent=5 // pred_fallthru
        _
      %p270 = scmp.le.s32.totalorder 2, %s17
      // Predicated region
      $region45: #{tpu_custom_call.1} parent=5 // pred_check
        %p271 = pneg %p270
      $region46: #{tpu_custom_call.1} parent=5 // pred_check_branch
        %273 = sbr.rel (%p271) target = $region48
      $region47: #{tpu_custom_call.1} parent=5 // pred_region
        %s274 = ssub.s32 %s17, 2
        // Predicated region
        $region49: #{tpu_custom_call.1} parent=47 // pred_check
          %p275 = pneg %p114
        $region50: #{tpu_custom_call.1} parent=47 // pred_check_branch
          %277 = sbr.rel (%p275) target = $region52
        $region51: #{tpu_custom_call.1} parent=47 // pred_region
          %s278 = sand.u32 %s99, 1
          %s279 = scalar_lea.sflag [#allocation4], %s278
          %s280 = sand.u32 %s99, 1
          %s281 = smul.addr %s280, 24
          %s282 = scalar_lea.vmem [#allocation7], %s281
          %283 = dma.done %s279, 384
        $region52: #{tpu_custom_call.1} parent=47 // pred_fallthru
          _
      $region48: #{tpu_custom_call.1} parent=5 // pred_fallthru
        _
    $region6: #{tpu_custom_call.1} parent=1 // loop_footer
      %s21 = sadd.s32 1, %s17
    $region7: #{tpu_custom_call.1} parent=1 // loop_footer_branch
      %16 = sbr.rel target = $region3
    $region8: #{tpu_custom_call.1} parent=1 // loop_exit
      _
    %284 = vsyncpa [#allocation3], 1
    %s285 = scalar_lea.sflag [#allocation3], 1
    %286 = vsyncpa %s285, 1
    %287 = vsyncpa [#allocation6], 1
    %s288 = scalar_lea.sflag [#allocation6], 1
    %289 = vsyncpa %s288, 1
    %290 = vsyncpa [#allocation4], 1
    %s291 = scalar_lea.sflag [#allocation4], 1
    %292 = vsyncpa %s291, 1

</llo_original>
